<compile_context>
chip_gen: v7x
topology: tpu7x:2x2x1
jax: 0.10.0
libtpu: 0.0.40
codegen_flags: <defaults>
</compile_context>

<pallas_src>
import functools

import jax
import jax.numpy as jnp
from jax import lax
from jax.experimental import pallas as pl
from jax.experimental.pallas import tpu as pltpu

_LANES = 128
_SUBLANES = 8
_TILE_ELEMS = _SUBLANES * _LANES           # one (8, 128) f32 vreg tile
_MAX_BLOCK_ROWS = 8192                     # cap; real block bounded by VMEM budget


def _vmem_budget_bytes():
    """(double-buffer budget, vmem_limit_bytes) chosen per TPU generation."""
    try:
        vmem_cap = int(pltpu.get_tpu_info().vmem_capacity_bytes)
    except Exception:
        vmem_cap = 64 * 1024 * 1024        # conservative (v7x per-TC VMEM)
    if vmem_cap >= 96 * 1024 * 1024:       # v5e / v6e: 128 MiB physical VMEM
        return 48 * 1024 * 1024, 64 * 1024 * 1024
    return 24 * 1024 * 1024, 32 * 1024 * 1024   # v7x: 64 MiB physical VMEM


def _int_pow(v, k):
    """v**k for static integer k >= 1 via square-and-multiply (VPU muls only)."""
    acc = None
    base = v
    while k:
        if k & 1:
            acc = base if acc is None else acc * base
        k >>= 1
        if k:
            base = base * base
    return acc


def _abs_pow(v, n):
    """|v| ** n, specialized at trace time.

    Integer n -> square-and-multiply (even n needs no abs at all); half-integer
    n -> sqrt composite (EUP slot); anything else falls back to jnp.power."""
    n_f = float(n)
    if n_f.is_integer() and 1 <= int(n_f) <= 64:
        k = int(n_f)
        if k % 2 == 0:
            return _int_pow(v * v, k // 2)          # even n: no abs needed
        return _int_pow(jnp.abs(v), k)
    if (2.0 * n_f).is_integer() and n_f > 0 and int(2.0 * n_f) <= 64:
        # |v|^n = sqrt(|v|)^(2n): one EUP sqrt + VPU muls.
        return _int_pow(jnp.sqrt(jnp.abs(v)), int(2.0 * n_f))
    # TODO(synk): arbitrary fractional n lowers to exp+log on the single EUP
    # slot and is EUP-bound rather than HBM-bound.
    return jnp.power(jnp.abs(v), jnp.float32(n_f))


def _denoise_loss_kernel(*refs, n_tensors, n, norm, rows, block_rows,
                         blocks_per_core, mask_start, total_steps):
    """Accumulates per-tensor partial sums of |x-y|^n (and |y|^n when norm) into
    a per-core-resident (1, T, 2, 8, 128) f32 vector accumulator.  The 1/n
    scaling, the cross-lane reduction and the cross-core reduction all happen
    once in the wrapper."""
    x_refs = refs[:n_tensors]
    y_refs = refs[n_tensors:2 * n_tensors]
    acc_ref = refs[2 * n_tensors]          # (1, T, 2, 8, 128) resident VMEM block

    c = pl.program_id(0)                   # core-split index ("parallel")
    j = pl.program_id(1)                   # block index within core ("arbitrary")
    g = c * blocks_per_core + j            # unclamped global block index

    @pl.when(j == 0)
    def _init():
        acc_ref[...] = jnp.zeros_like(acc_ref)

    def _accumulate(valid):
        for t in range(n_tensors):         # static unroll over the tensor list
            x = x_refs[t][...].astype(jnp.float32)
            y = y_refs[t][...].astype(jnp.float32)
            loss_tile = _abs_pow(x - y, n)          # 1/n hoisted to the wrapper
            if valid is not None:
                loss_tile = jnp.where(valid, loss_tile, 0.0)
            # (block_rows,128)->(block_rows//8,8,128) is a layout no-op; the
            # axis-0 sum is plain VPU vreg adds into the (8,128) accumulator.
            acc_ref[0, t, 0] += loss_tile.reshape(-1, _SUBLANES, _LANES).sum(axis=0)
            if norm:
                norm_tile = _abs_pow(y, n)
                if valid is not None:
                    norm_tile = jnp.where(valid, norm_tile, 0.0)
                acc_ref[0, t, 1] += norm_tile.reshape(-1, _SUBLANES, _LANES).sum(axis=0)

    def _make_mask():
        row_ids = lax.broadcasted_iota(jnp.int32, (block_rows, _LANES), 0)
        return (row_ids + g * block_rows) < rows

    if mask_start >= total_steps:
        # No ragged block and the core split divides evenly: never mask.
        _accumulate(None)
    elif mask_start <= 0:
        _accumulate(_make_mask())
    else:
        # Masking only on the trailing step(s); the fast path is mask-free.
        @pl.when(g < mask_start)
        def _unmasked():
            _accumulate(None)

        @pl.when(g >= mask_start)
        def _masked():
            _accumulate(_make_mask())


def _split_lane_slab(a):
    """Split a tensor into (lane-dense main slab, tiny tail, true numel).

    The main slab is the largest 1024-element-multiple prefix reshaped to
    (rows, 128) — a free reshape when numel % 1024 == 0 (no jnp.pad copy).
    The <1024-element remainder is handled with a tiny jnp reduction."""
    flat = jnp.asarray(a).reshape(-1)
    total = int(flat.shape[0])
    main = (total // _TILE_ELEMS) * _TILE_ELEMS
    if main == total:
        return flat.reshape(total // _LANES, _LANES), flat[:0], total
    if main == 0:
        return flat[:0].reshape(0, _LANES), flat, total
    return flat[:main].reshape(main // _LANES, _LANES), flat[main:], total


def _main_sums_pallas(slabs_x, slabs_y, *, n, norm, max_block_rows):
    """One fused pallas_call over T equal-sized (rows, 128) slabs.
    Returns (loss_sums, norm_sums) of shape (T,), un-normalized."""
    t_count = len(slabs_x)
    rows = slabs_x[0].shape[0]

    itemsizes = [s.dtype.itemsize for s in slabs_x + slabs_y]
    # Sub-32-bit dtypes pack along sublanes: round blocks to the packed-tile
    # sublane multiple of the narrowest input dtype (8 f32 / 16 bf16 / 32 int8).
    row_align = max(_SUBLANES, 32 // min(itemsizes))

    budget, vmem_limit = _vmem_budget_bytes()
    per_row_in = _LANES * sum(itemsizes)                      # input bytes / slab row
    per_row_tmp = _LANES * 4 * (4 if norm else 3) * t_count   # f32 upcast/term temps
    budget_rows = budget // (2 * per_row_in + per_row_tmp)    # inputs double-buffered

    cand = min(int(max_block_rows), int(budget_rows))
    cand = max(row_align, (cand // row_align) * row_align)
    block_rows = min(cand, rows)          # full-extent block is always legal

    num_blocks = pl.cdiv(rows, block_rows)
    # Megacore split: v7x has 2 TensorCores; each gets its own resident
    # accumulator block via the leading "parallel" axis.  Near-free on 1-TC chips.
    n_core = 2 if num_blocks >= 2 else 1
    blocks_per_core = pl.cdiv(num_blocks, n_core)
    total_steps = n_core * blocks_per_core
    mask_start = num_blocks - 1 if (rows % block_rows) != 0 else num_blocks

    last_block = num_blocks - 1
    if total_steps > num_blocks:
        def in_map(c, j):
            # Clamp the duplicate trailing step(s); the kernel masks them to zero.
            return (jnp.minimum(c * blocks_per_core + j, last_block), 0)
    else:
        def in_map(c, j):
            return (c * blocks_per_core + j, 0)

    kernel = functools.partial(
        _denoise_loss_kernel,
        n_tensors=t_count, n=n, norm=norm, rows=rows, block_rows=block_rows,
        blocks_per_core=blocks_per_core, mask_start=mask_start,
        total_steps=total_steps)

    acc = pl.pallas_call(
        kernel,
        out_shape=jax.ShapeDtypeStruct((n_core, t_count, 2, _SUBLANES, _LANES),
                                       jnp.float32),
        grid_spec=pltpu.PrefetchScalarGridSpec(
            num_scalar_prefetch=0,
            grid=(n_core, blocks_per_core),
            in_specs=[pl.BlockSpec((block_rows, _LANES), in_map)
                      for _ in range(2 * t_count)],
            out_specs=pl.BlockSpec((1, t_count, 2, _SUBLANES, _LANES),
                                   lambda c, j: (c, 0, 0, 0, 0)),
        ),
        compiler_params=pltpu.CompilerParams(
            dimension_semantics=("parallel", "arbitrary"),
            vmem_limit_bytes=vmem_limit),
    )(*slabs_x, *slabs_y)

    # Single tiny cross-core + cross-lane reduction, outside the hot loop.
    sums = jnp.sum(acc, axis=(0, 3, 4))                 # (T, 2)
    return sums[:, 0], sums[:, 1]


def _denoise_loss_sums(xs, ys, *, n, norm, max_block_rows=_MAX_BLOCK_ROWS):
    """Raw per-tensor sums of |x-y|^n and |y|^n plus true element counts."""
    assert len(xs) == len(ys) and len(xs) > 0
    assert float(n) > 0.0
    t_count = len(xs)

    mains_x, mains_y, tails_x, tails_y, totals = [], [], [], [], []
    for x, y in zip(xs, ys):
        xm, xt, tot = _split_lane_slab(x)
        ym, yt, tot_y = _split_lane_slab(y)
        assert tot == tot_y, "x/y element-count mismatch"
        mains_x.append(xm); mains_y.append(ym)
        tails_x.append(xt); tails_y.append(yt)
        totals.append(tot)

    assert all(t == totals[0] for t in totals), (
        "fused path requires equal-sized tensors")
    rows = mains_x[0].shape[0]

    if rows > 0:
        loss_sums, norm_sums = _main_sums_pallas(
            mains_x, mains_y, n=n, norm=norm, max_block_rows=max_block_rows)
    else:
        loss_sums = jnp.zeros((t_count,), jnp.float32)
        norm_sums = jnp.zeros((t_count,), jnp.float32)

    tail_len = totals[0] - rows * _LANES
    if tail_len > 0:
        # <1024 leftover elements per tensor: fold in with a tiny jnp reduction
        # instead of padding (and copying) every full tensor.
        xt = jnp.stack(tails_x).astype(jnp.float32)
        yt = jnp.stack(tails_y).astype(jnp.float32)
        loss_sums = loss_sums + jnp.sum(jnp.power(jnp.abs(xt - yt), float(n)), axis=1)
        if norm:
            norm_sums = norm_sums + jnp.sum(jnp.power(jnp.abs(yt), float(n)), axis=1)

    counts = jnp.asarray(totals, dtype=jnp.float32)
    return loss_sums, norm_sums, counts


def _finalize(loss_sums, norm_sums, counts, *, n, norm):
    losses = loss_sums / (counts * float(n))        # 1/n hoisted out of the kernel
    if norm:
        losses = losses / (norm_sums / counts)
    return losses


def denoise_loss(x, y, *, n=2, hard_mining=0.0, norm=False,
                 max_block_rows=_MAX_BLOCK_ROWS):
    """Pallas equivalent of DenoiseLoss.forward (hard_mining == 0 path)."""
    assert 0.0 <= hard_mining <= 1.0
    if hard_mining > 0:
        # TODO(synk): top-k hard mining (data-dependent gather) not implemented.
        raise NotImplementedError("hard_mining > 0 not supported in the Pallas kernel")
    loss_sums, norm_sums, counts = _denoise_loss_sums(
        [x], [y], n=n, norm=norm, max_block_rows=max_block_rows)
    return _finalize(loss_sums, norm_sums, counts, n=n, norm=norm)[0]


def loss_forward(xs, ys, *, n=2, hard_mining=0.0, norm=False,
                 max_block_rows=_MAX_BLOCK_ROWS):
    """Pallas equivalent of Loss.forward: list of per-tensor scalar losses."""
    assert len(xs) == len(ys)
    assert 0.0 <= hard_mining <= 1.0
    if hard_mining > 0:
        # TODO(synk): top-k hard mining (data-dependent gather) not implemented.
        raise NotImplementedError("hard_mining > 0 not supported in the Pallas kernel")
    if not xs:
        return []
    # Group equal-size tensors: one fused pallas_call per group amortizes
    # launch / pipeline warm-up across the whole list.
    groups = {}
    for idx, x in enumerate(xs):
        groups.setdefault(int(jnp.asarray(x).size), []).append(idx)
    results = [None] * len(xs)
    for _, idxs in groups.items():
        gx = [xs[i] for i in idxs]
        gy = [ys[i] for i in idxs]
        loss_sums, norm_sums, counts = _denoise_loss_sums(
            gx, gy, n=n, norm=norm, max_block_rows=max_block_rows)
        losses = _finalize(loss_sums, norm_sums, counts, n=n, norm=norm)
        for pos, i in enumerate(idxs):
            results[i] = losses[pos]
    return results


def _reference_denoise_loss(x, y, n=2, norm=False):
    x = jnp.asarray(x).astype(jnp.float32)
    y = jnp.asarray(y).astype(jnp.float32)
    loss = jnp.power(jnp.abs(x - y), n) / n
    loss = jnp.mean(loss)
    if norm:
        loss = loss / jnp.mean(jnp.power(jnp.abs(y), n))
    return loss


if __name__ == "__main__":
    key = jax.random.PRNGKey(0)

    # Loss.forward receives lists of tensors; use 3 NCHW tensors of (2, 4, 16, 16).
    shapes = [(2, 4, 16, 16), (2, 4, 16, 16), (2, 4, 16, 16)]
    xs, ys = [], []
    for s in shapes:
        key, kx, ky = jax.random.split(key, 3)
        xs.append(jax.random.normal(kx, s, dtype=jnp.float32))
        ys.append(jax.random.normal(ky, s, dtype=jnp.float32))

    # 1) Main path: fused single pallas_call over the list (n=2, norm=False).
    out = loss_forward(xs, ys, n=2, hard_mining=0.0, norm=False)
    out = [jax.block_until_ready(o) for o in out]
    for o, x, y in zip(out, xs, ys):
        ref = _reference_denoise_loss(x, y, n=2, norm=False)
        assert jnp.allclose(o, ref, rtol=1e-4, atol=1e-6), (o, ref)

    # 2) norm=True path.
    out_n = loss_forward(xs, ys, n=2, hard_mining=0.0, norm=True)
    out_n = [jax.block_until_ready(o) for o in out_n]
    for o, x, y in zip(out_n, xs, ys):
        ref = _reference_denoise_loss(x, y, n=2, norm=True)
        assert jnp.allclose(o, ref, rtol=1e-4, atol=1e-6), (o, ref)

    # 3) Multi-block + megacore split + ragged tail + non-1024-multiple numel, n=3.
    key, kx, ky = jax.random.split(key, 3)
    xr = jax.random.normal(kx, (1, 3, 100, 100), dtype=jnp.float32)
    yr = jax.random.normal(ky, (1, 3, 100, 100), dtype=jnp.float32)
    o = denoise_loss(xr, yr, n=3, norm=True, max_block_rows=64)
    o = jax.block_until_ready(o)
    ref = _reference_denoise_loss(xr, yr, n=3, norm=True)
    assert jnp.allclose(o, ref, rtol=1e-4, atol=1e-6), (o, ref)

    # 4) Half-integer exponent (sqrt-composite path), n=0.5.
    o = denoise_loss(xr, yr, n=0.5, norm=False)
    o = jax.block_until_ready(o)
    ref = _reference_denoise_loss(xr, yr, n=0.5, norm=False)
    assert jnp.allclose(o, ref, rtol=1e-4, atol=1e-6), (o, ref)

    # 5) bf16 inputs (packed-sublane block alignment), n=2, norm=True.
    key, kx, ky = jax.random.split(key, 3)
    xb = jax.random.normal(kx, (2, 4, 16, 16), dtype=jnp.bfloat16)
    yb = jax.random.normal(ky, (2, 4, 16, 16), dtype=jnp.bfloat16)
    o = denoise_loss(xb, yb, n=2, norm=True)
    o = jax.block_until_ready(o)
    ref = _reference_denoise_loss(xb, yb, n=2, norm=True)
    assert jnp.allclose(o, ref, rtol=1e-3, atol=1e-6), (o, ref)

    # 6) Mixed shapes: grouped fused calls + tiny-tensor jnp fallback.
    key, kx, ky = jax.random.split(key, 3)
    xm = [xs[0], jax.random.normal(kx, (1, 3, 8, 8), dtype=jnp.float32), xs[2]]
    ym = [ys[0], jax.random.normal(ky, (1, 3, 8, 8), dtype=jnp.float32), ys[2]]
    out_m = loss_forward(xm, ym, n=2, hard_mining=0.0, norm=True)
    out_m = [jax.block_until_ready(o) for o in out_m]
    for o, x, y in zip(out_m, xm, ym):
        ref = _reference_denoise_loss(x, y, n=2, norm=True)
        assert jnp.allclose(o, ref, rtol=1e-4, atol=1e-6), (o, ref)

    print("KERNEL_OK")
</pallas_src>

<mosaic_0001>
module attributes {stable_mosaic.version = 11 : i64} {
  func.func @_denoise_loss_kernel(%arg0: i32, %arg1: i32, %arg2: memref<16x128xf32, #tpu.memory_space<vmem>>, %arg3: memref<16x128xf32, #tpu.memory_space<vmem>>, %arg4: memref<16x128xf32, #tpu.memory_space<vmem>>, %arg5: memref<16x128xf32, #tpu.memory_space<vmem>>, %arg6: memref<16x128xf32, #tpu.memory_space<vmem>>, %arg7: memref<16x128xf32, #tpu.memory_space<vmem>>, %arg8: memref<1x3x2x8x128xf32, #tpu.memory_space<vmem>>) attributes {dimension_semantics = [#tpu.dimension_semantics<parallel>, #tpu.dimension_semantics<arbitrary>], iteration_bounds = array<i64: 1, 1>, scalar_prefetch = 0 : i64, scratch_operands = 0 : i64, tpu.core_type = #tpu.core_type<tc>, window_params = [{transform_indices = @transform_0, window_bounds = array<i64: 16, 128>}, {transform_indices = @transform_1, window_bounds = array<i64: 16, 128>}, {transform_indices = @transform_2, window_bounds = array<i64: 16, 128>}, {transform_indices = @transform_3, window_bounds = array<i64: 16, 128>}, {transform_indices = @transform_4, window_bounds = array<i64: 16, 128>}, {transform_indices = @transform_5, window_bounds = array<i64: 16, 128>}, {transform_indices = @transform_6, window_bounds = array<i64: 1, 3, 2, 8, 128>}]} {
    %c0_i32 = arith.constant 0 : i32
    %0 = arith.cmpi eq, %arg1, %c0_i32 : i32
    %1 = arith.extui %0 : i1 to i32
    %c0_i32_0 = arith.constant 0 : i32
    %2 = arith.cmpi ne, %1, %c0_i32_0 : i32
    scf.if %2 {
      %cst_42 = arith.constant 0.000000e+00 : f32
      %39 = vector.broadcast %cst_42 : f32 to vector<1x3x2x8x128xf32>
      %c0_43 = arith.constant 0 : index
      %c0_44 = arith.constant 0 : index
      %c0_45 = arith.constant 0 : index
      %c0_46 = arith.constant 0 : index
      %c0_47 = arith.constant 0 : index
      %40 = vector.load %arg8[%c0_43, %c0_44, %c0_45, %c0_46, %c0_47] : memref<1x3x2x8x128xf32, #tpu.memory_space<vmem>>, vector<1x3x2x8x128xf32>
      tpu.vector_store %arg8[%c0_43, %c0_44, %c0_45, %c0_46, %c0_47], %39 {strides = array<i32>} : memref<1x3x2x8x128xf32, #tpu.memory_space<vmem>>, vector<1x3x2x8x128xf32>,
    } else {
    }
    %c0 = arith.constant 0 : index
    %c0_1 = arith.constant 0 : index
    %3 = vector.load %arg2[%c0, %c0_1] : memref<16x128xf32, #tpu.memory_space<vmem>>, vector<16x128xf32>
    %c0_2 = arith.constant 0 : index
    %c0_3 = arith.constant 0 : index
    %4 = vector.load %arg5[%c0_2, %c0_3] : memref<16x128xf32, #tpu.memory_space<vmem>>, vector<16x128xf32>
    %5 = arith.subf %3, %4 : vector<16x128xf32>
    %6 = arith.mulf %5, %5 : vector<16x128xf32>
    %c0_4 = arith.constant 0 : index
    %c0_5 = arith.constant 0 : index
    %c0_6 = arith.constant 0 : index
    %c0_7 = arith.constant 0 : index
    %c0_8 = arith.constant 0 : index
    %7 = vector.load %arg8[%c0_4, %c0_5, %c0_6, %c0_7, %c0_8] : memref<1x3x2x8x128xf32, #tpu.memory_space<vmem>>, vector<1x1x1x8x128xf32>
    %8 = vector.shape_cast %7 : vector<1x1x1x8x128xf32> to vector<8x128xf32>
    %9 = vector.shape_cast %6 : vector<16x128xf32> to vector<2x8x128xf32>
    %cst = arith.constant dense<0.000000e+00> : vector<8x128xf32>
    %10 = vector.multi_reduction <add>, %9, %cst [0] : vector<2x8x128xf32> to vector<8x128xf32>
    %11 = arith.addf %8, %10 : vector<8x128xf32>
    %c0_9 = arith.constant 0 : index
    %c0_10 = arith.constant 0 : index
    %c0_11 = arith.constant 0 : index
    %c0_12 = arith.constant 0 : index
    %c0_13 = arith.constant 0 : index
    %12 = vector.load %arg8[%c0_9, %c0_10, %c0_11, %c0_12, %c0_13] : memref<1x3x2x8x128xf32, #tpu.memory_space<vmem>>, vector<1x1x1x8x128xf32>
    %13 = vector.shape_cast %12 : vector<1x1x1x8x128xf32> to vector<8x128xf32>
    %14 = vector.shape_cast %11 : vector<8x128xf32> to vector<1x1x1x8x128xf32>
    tpu.vector_store %arg8[%c0_9, %c0_10, %c0_11, %c0_12, %c0_13], %14 {strides = array<i32>} : memref<1x3x2x8x128xf32, #tpu.memory_space<vmem>>, vector<1x1x1x8x128xf32>,
    %c0_14 = arith.constant 0 : index
    %c0_15 = arith.constant 0 : index
    %15 = vector.load %arg3[%c0_14, %c0_15] : memref<16x128xf32, #tpu.memory_space<vmem>>, vector<16x128xf32>
    %c0_16 = arith.constant 0 : index
    %c0_17 = arith.constant 0 : index
    %16 = vector.load %arg6[%c0_16, %c0_17] : memref<16x128xf32, #tpu.memory_space<vmem>>, vector<16x128xf32>
    %17 = arith.subf %15, %16 : vector<16x128xf32>
    %18 = arith.mulf %17, %17 : vector<16x128xf32>
    %c0_18 = arith.constant 0 : index
    %c1 = arith.constant 1 : index
    %c0_19 = arith.constant 0 : index
    %c0_20 = arith.constant 0 : index
    %c0_21 = arith.constant 0 : index
    %19 = vector.load %arg8[%c0_18, %c1, %c0_19, %c0_20, %c0_21] : memref<1x3x2x8x128xf32, #tpu.memory_space<vmem>>, vector<1x1x1x8x128xf32>
    %20 = vector.shape_cast %19 : vector<1x1x1x8x128xf32> to vector<8x128xf32>
    %21 = vector.shape_cast %18 : vector<16x128xf32> to vector<2x8x128xf32>
    %cst_22 = arith.constant dense<0.000000e+00> : vector<8x128xf32>
    %22 = vector.multi_reduction <add>, %21, %cst_22 [0] : vector<2x8x128xf32> to vector<8x128xf32>
    %23 = arith.addf %20, %22 : vector<8x128xf32>
    %c0_23 = arith.constant 0 : index
    %c1_24 = arith.constant 1 : index
    %c0_25 = arith.constant 0 : index
    %c0_26 = arith.constant 0 : index
    %c0_27 = arith.constant 0 : index
    %24 = vector.load %arg8[%c0_23, %c1_24, %c0_25, %c0_26, %c0_27] : memref<1x3x2x8x128xf32, #tpu.memory_space<vmem>>, vector<1x1x1x8x128xf32>
    %25 = vector.shape_cast %24 : vector<1x1x1x8x128xf32> to vector<8x128xf32>
    %26 = vector.shape_cast %23 : vector<8x128xf32> to vector<1x1x1x8x128xf32>
    tpu.vector_store %arg8[%c0_23, %c1_24, %c0_25, %c0_26, %c0_27], %26 {strides = array<i32>} : memref<1x3x2x8x128xf32, #tpu.memory_space<vmem>>, vector<1x1x1x8x128xf32>,
    %c0_28 = arith.constant 0 : index
    %c0_29 = arith.constant 0 : index
    %27 = vector.load %arg4[%c0_28, %c0_29] : memref<16x128xf32, #tpu.memory_space<vmem>>, vector<16x128xf32>
    %c0_30 = arith.constant 0 : index
    %c0_31 = arith.constant 0 : index
    %28 = vector.load %arg7[%c0_30, %c0_31] : memref<16x128xf32, #tpu.memory_space<vmem>>, vector<16x128xf32>
    %29 = arith.subf %27, %28 : vector<16x128xf32>
    %30 = arith.mulf %29, %29 : vector<16x128xf32>
    %c0_32 = arith.constant 0 : index
    %c2 = arith.constant 2 : index
    %c0_33 = arith.constant 0 : index
    %c0_34 = arith.constant 0 : index
    %c0_35 = arith.constant 0 : index
    %31 = vector.load %arg8[%c0_32, %c2, %c0_33, %c0_34, %c0_35] : memref<1x3x2x8x128xf32, #tpu.memory_space<vmem>>, vector<1x1x1x8x128xf32>
    %32 = vector.shape_cast %31 : vector<1x1x1x8x128xf32> to vector<8x128xf32>
    %33 = vector.shape_cast %30 : vector<16x128xf32> to vector<2x8x128xf32>
    %cst_36 = arith.constant dense<0.000000e+00> : vector<8x128xf32>
    %34 = vector.multi_reduction <add>, %33, %cst_36 [0] : vector<2x8x128xf32> to vector<8x128xf32>
    %35 = arith.addf %32, %34 : vector<8x128xf32>
    %c0_37 = arith.constant 0 : index
    %c2_38 = arith.constant 2 : index
    %c0_39 = arith.constant 0 : index
    %c0_40 = arith.constant 0 : index
    %c0_41 = arith.constant 0 : index
    %36 = vector.load %arg8[%c0_37, %c2_38, %c0_39, %c0_40, %c0_41] : memref<1x3x2x8x128xf32, #tpu.memory_space<vmem>>, vector<1x1x1x8x128xf32>
    %37 = vector.shape_cast %36 : vector<1x1x1x8x128xf32> to vector<8x128xf32>
    %38 = vector.shape_cast %35 : vector<8x128xf32> to vector<1x1x1x8x128xf32>
    tpu.vector_store %arg8[%c0_37, %c2_38, %c0_39, %c0_40, %c0_41], %38 {strides = array<i32>} : memref<1x3x2x8x128xf32, #tpu.memory_space<vmem>>, vector<1x1x1x8x128xf32>,
    return
  }
  func.func @transform_0(%arg0: i32, %arg1: i32) -> (i32, i32) {
    %c1_i32 = arith.constant 1 : i32
    %0 = arith.muli %arg0, %c1_i32 : i32
    %1 = arith.addi %0, %arg1 : i32
    %c0_i32 = arith.constant 0 : i32
    %c0_i32_0 = arith.constant 0 : i32
    return %1, %c0_i32 : i32, i32
  }
  func.func @transform_1(%arg0: i32, %arg1: i32) -> (i32, i32) {
    %c1_i32 = arith.constant 1 : i32
    %0 = arith.muli %arg0, %c1_i32 : i32
    %1 = arith.addi %0, %arg1 : i32
    %c0_i32 = arith.constant 0 : i32
    %c0_i32_0 = arith.constant 0 : i32
    return %1, %c0_i32 : i32, i32
  }
  func.func @transform_2(%arg0: i32, %arg1: i32) -> (i32, i32) {
    %c1_i32 = arith.constant 1 : i32
    %0 = arith.muli %arg0, %c1_i32 : i32
    %1 = arith.addi %0, %arg1 : i32
    %c0_i32 = arith.constant 0 : i32
    %c0_i32_0 = arith.constant 0 : i32
    return %1, %c0_i32 : i32, i32
  }
  func.func @transform_3(%arg0: i32, %arg1: i32) -> (i32, i32) {
    %c1_i32 = arith.constant 1 : i32
    %0 = arith.muli %arg0, %c1_i32 : i32
    %1 = arith.addi %0, %arg1 : i32
    %c0_i32 = arith.constant 0 : i32
    %c0_i32_0 = arith.constant 0 : i32
    return %1, %c0_i32 : i32, i32
  }
  func.func @transform_4(%arg0: i32, %arg1: i32) -> (i32, i32) {
    %c1_i32 = arith.constant 1 : i32
    %0 = arith.muli %arg0, %c1_i32 : i32
    %1 = arith.addi %0, %arg1 : i32
    %c0_i32 = arith.constant 0 : i32
    %c0_i32_0 = arith.constant 0 : i32
    return %1, %c0_i32 : i32, i32
  }
  func.func @transform_5(%arg0: i32, %arg1: i32) -> (i32, i32) {
    %c1_i32 = arith.constant 1 : i32
    %0 = arith.muli %arg0, %c1_i32 : i32
    %1 = arith.addi %0, %arg1 : i32
    %c0_i32 = arith.constant 0 : i32
    %c0_i32_0 = arith.constant 0 : i32
    return %1, %c0_i32 : i32, i32
  }
  func.func @transform_6(%arg0: i32, %arg1: i32) -> (i32, i32, i32, i32, i32) {
    %c0_i32 = arith.constant 0 : i32
    %c0_i32_0 = arith.constant 0 : i32
    %c0_i32_1 = arith.constant 0 : i32
    %c0_i32_2 = arith.constant 0 : i32
    %c0_i32_3 = arith.constant 0 : i32
    return %arg0, %c0_i32, %c0_i32_0, %c0_i32_1, %c0_i32_2 : i32, i32, i32, i32, i32
  }
}

</mosaic_0001>

<llo_original>
// kernel: tpu_custom_call.1
$region0: #{tpu_custom_call.1}
  #allocation0 [shape = 'u32[]', space=smem, size = 0x4, offset = 0x4, fixed_abs, tag = 'smem constant byte address 0x4 - core index']
  #allocation1 [shape = 'u32[144,128]{1,0:T(1,128)}', space=vmem, size = 0x12000, scoped, tag = 'internal scratch']
  %s0 = inlined_call_operand.hbm [shape: f32[16,128], index: 0, kind: input, shape index: {}]
  %s1 = inlined_call_operand.hbm [shape: f32[16,128], index: 1, kind: input, shape index: {}]
  %s2 = inlined_call_operand.hbm [shape: f32[16,128], index: 2, kind: input, shape index: {}]
  %s3 = inlined_call_operand.hbm [shape: f32[16,128], index: 3, kind: input, shape index: {}]
  %s4 = inlined_call_operand.hbm [shape: f32[16,128], index: 4, kind: input, shape index: {}]
  %s5 = inlined_call_operand.vmem [shape: f32[16,128], index: 5, kind: input, shape index: {}]
  %s6 = inlined_call_operand.hbm [shape: f32[1,3,2,8,128], index: 6, kind: output, shape index: {}]
  %s7 = sld [smem:[#allocation0]]
  $region58: #{tpu_custom_call.1} parent=0
    _
  %s9 = ssub.s32 1, %s7
  %s10 = scalar_select 0, %s9, %s7
  $region1: #{tpu_custom_call.1} parent=0
    #allocation2 [shape = 'u8[8192]{0}', space=vmem, size = 0x2000, scoped, tag = 'input window, operand 0, single buffered']
    #allocation3 [shape = 's32[1]{0}', space=sflag, size = 0x4, scoped, tag = 'scoped memory for tpu_custom_call.1']
    #allocation4 [shape = 's32[1]{0}', space=sflag, size = 0x4, scoped, tag = 'scoped memory for tpu_custom_call.1']
    #allocation5 [shape = 'u8[8192]{0}', space=vmem, size = 0x2000, scoped, tag = 'input window, operand 1, single buffered']
    #allocation6 [shape = 's32[1]{0}', space=sflag, size = 0x4, scoped, tag = 'scoped memory for tpu_custom_call.1']
    #allocation7 [shape = 'u8[8192]{0}', space=vmem, size = 0x2000, scoped, tag = 'input window, operand 2, single buffered']
    #allocation8 [shape = 'u8[8192]{0}', space=vmem, size = 0x2000, scoped, tag = 'input window, operand 3, single buffered']
    #allocation9 [shape = 's32[1]{0}', space=sflag, size = 0x4, scoped, tag = 'scoped memory for tpu_custom_call.1']
    #allocation10 [shape = 'u8[8192]{0}', space=vmem, size = 0x2000, scoped, tag = 'input window, operand 4, single buffered']
    #allocation11 [shape = 'u8[24576]{0}', space=vmem, size = 0x6000, scoped, tag = 'output window, operand 0, single buffered']
    %11 = vsyncpa [#allocation3], 0
    %12 = vsyncpa [#allocation6], 0
    %13 = vsyncpa [#allocation9], 0
    %14 = vsyncpa [#allocation4], 0
    // Predicated region
    $region2: #{tpu_custom_call.1} parent=1 // pred_check
      _
    $region3: #{tpu_custom_call.1} parent=1 // pred_check_branch
      %16 = sbr.rel (0) target = $region5
    $region4: #{tpu_custom_call.1} parent=1 // pred_region
      %s17 = sadd.s32 0, 0
      %s18 = smul.u32 2, %s17
      %s20 = ssub.s32 256, 256
      %21 = vsyncadd [#allocation3], %s20
      %s22 = smul.addr %s18, 128
      %s23 = scalar_lea.hbm %s0, %s22
      %s24 = sshll.u32 [#allocation2], 4
      %s25 = int_to_ptr.vmem [resolvable:$true] %s24
      %30 = dma.hbm_to_vmem [thread:$0]  %s23, 256, %s25, [#allocation3], 128, 128, 8
    $region5: #{tpu_custom_call.1} parent=1 // pred_fallthru
      _
    // Predicated region
    $region6: #{tpu_custom_call.1} parent=1 // pred_check
      _
    $region7: #{tpu_custom_call.1} parent=1 // pred_check_branch
      %32 = sbr.rel (0) target = $region9
    $region8: #{tpu_custom_call.1} parent=1 // pred_region
      %s33 = sadd.s32 0, 0
      %s34 = smul.u32 2, %s33
      %s36 = ssub.s32 256, 256
      %37 = vsyncadd [#allocation6], %s36
      %s38 = smul.addr %s34, 128
      %s39 = scalar_lea.hbm %s1, %s38
      %s40 = sshll.u32 [#allocation5], 4
      %s41 = int_to_ptr.vmem [resolvable:$true] %s40
      %46 = dma.hbm_to_vmem [thread:$0]  %s39, 256, %s41, [#allocation6], 128, 128, 8
    $region9: #{tpu_custom_call.1} parent=1 // pred_fallthru
      _
    // Predicated region
    $region10: #{tpu_custom_call.1} parent=1 // pred_check
      _
    $region11: #{tpu_custom_call.1} parent=1 // pred_check_branch
      %48 = sbr.rel (0) target = $region13
    $region12: #{tpu_custom_call.1} parent=1 // pred_region
      %s49 = sadd.s32 0, 0
      %s50 = smul.u32 2, %s49
      %s52 = ssub.s32 256, 256
      %53 = vsyncadd [#allocation6], %s52
      %s54 = smul.addr %s50, 128
      %s55 = scalar_lea.hbm %s2, %s54
      %s56 = sshll.u32 [#allocation7], 4
      %s57 = int_to_ptr.vmem [resolvable:$true] %s56
      %62 = dma.hbm_to_vmem [thread:$0]  %s55, 256, %s57, [#allocation6], 128, 128, 8
    $region13: #{tpu_custom_call.1} parent=1 // pred_fallthru
      _
    // Predicated region
    $region14: #{tpu_custom_call.1} parent=1 // pred_check
      _
    $region15: #{tpu_custom_call.1} parent=1 // pred_check_branch
      %64 = sbr.rel (0) target = $region17
    $region16: #{tpu_custom_call.1} parent=1 // pred_region
      %s65 = sadd.s32 0, 0
      %s66 = smul.u32 2, %s65
      %s68 = ssub.s32 256, 256
      %69 = vsyncadd [#allocation9], %s68
      %s70 = smul.addr %s66, 128
      %s71 = scalar_lea.hbm %s3, %s70
      %s72 = sshll.u32 [#allocation8], 4
      %s73 = int_to_ptr.vmem [resolvable:$true] %s72
      %78 = dma.hbm_to_vmem [thread:$0]  %s71, 256, %s73, [#allocation9], 128, 128, 8
    $region17: #{tpu_custom_call.1} parent=1 // pred_fallthru
      _
    // Predicated region
    $region18: #{tpu_custom_call.1} parent=1 // pred_check
      _
    $region19: #{tpu_custom_call.1} parent=1 // pred_check_branch
      %80 = sbr.rel (0) target = $region21
    $region20: #{tpu_custom_call.1} parent=1 // pred_region
      %s81 = sadd.s32 0, 0
      %s82 = smul.u32 2, %s81
      %s84 = ssub.s32 256, 256
      %85 = vsyncadd [#allocation9], %s84
      %s86 = smul.addr %s82, 128
      %s87 = scalar_lea.hbm %s4, %s86
      %s88 = sshll.u32 [#allocation10], 4
      %s89 = int_to_ptr.vmem [resolvable:$true] %s88
      %94 = dma.hbm_to_vmem [thread:$0]  %s87, 256, %s89, [#allocation9], 128, 128, 8
    $region21: #{tpu_custom_call.1} parent=1 // pred_fallthru
      _
    // Predicated region
    $region22: #{tpu_custom_call.1} parent=1 // pred_check
      _
    $region23: #{tpu_custom_call.1} parent=1 // pred_check_branch
      %96 = sbr.rel (0) target = $region25
    $region24: #{tpu_custom_call.1} parent=1 // pred_region
      %s97 = sadd.s32 0, 0
      %s98 = smul.u32 2, %s97
      %p99 = scmp.lt.s32.totalorder %s98, 1
      %s100 = scalar_select %p99, %s98, 1
      %s101 = smul.addr %s100, 8
      %s102 = scalar_lea.vmem %s5, %s101
      %s103 = sadd.s32 0, 0
      %s104 = smul.u32 2, %s103
    $region25: #{tpu_custom_call.1} parent=1 // pred_fallthru
      _
    // Predicated region
    $region26: #{tpu_custom_call.1} parent=1 // pred_check
      _
    $region27: #{tpu_custom_call.1} parent=1 // pred_check_branch
      %106 = sbr.rel (0) target = $region29
    $region28: #{tpu_custom_call.1} parent=1 // pred_region
      %107 = dma.done [#allocation3], 256
    $region29: #{tpu_custom_call.1} parent=1 // pred_fallthru
      _
    // Predicated region
    $region30: #{tpu_custom_call.1} parent=1 // pred_check
      _
    $region31: #{tpu_custom_call.1} parent=1 // pred_check_branch
      %109 = sbr.rel (0) target = $region33
    $region32: #{tpu_custom_call.1} parent=1 // pred_region
      %110 = dma.done [#allocation6], 256
    $region33: #{tpu_custom_call.1} parent=1 // pred_fallthru
      _
    // Predicated region
    $region34: #{tpu_custom_call.1} parent=1 // pred_check
      _
    $region35: #{tpu_custom_call.1} parent=1 // pred_check_branch
      %112 = sbr.rel (0) target = $region37
    $region36: #{tpu_custom_call.1} parent=1 // pred_region
      %113 = dma.done [#allocation6], 256
    $region37: #{tpu_custom_call.1} parent=1 // pred_fallthru
      _
    // Predicated region
    $region38: #{tpu_custom_call.1} parent=1 // pred_check
      _
    $region39: #{tpu_custom_call.1} parent=1 // pred_check_branch
      %115 = sbr.rel (0) target = $region41
    $region40: #{tpu_custom_call.1} parent=1 // pred_region
      %116 = dma.done [#allocation9], 256
    $region41: #{tpu_custom_call.1} parent=1 // pred_fallthru
      _
    // Predicated region
    $region42: #{tpu_custom_call.1} parent=1 // pred_check
      _
    $region43: #{tpu_custom_call.1} parent=1 // pred_check_branch
      %118 = sbr.rel (0) target = $region45
    $region44: #{tpu_custom_call.1} parent=1 // pred_region
      %119 = dma.done [#allocation9], 256
    $region45: #{tpu_custom_call.1} parent=1 // pred_fallthru
      _
    %s120 = sadd.s32 0, 0
    %s121 = smul.u32 2, %s120
    %p122 = scmp.lt.s32.totalorder %s121, 1
    %s123 = scalar_select %p122, %s121, 1
    %s124 = smul.addr %s123, 8
    %s125 = scalar_lea.vmem %s5, %s124
    %s126 = sadd.s32 0, 0
    %s127 = smul.u32 2, %s126
    %s128 = sadd.s32 0, 0
    %s129 = smul.u32 2, %s128
    %s130 = sadd.s32 0, 0
    %s131 = smul.u32 2, %s130
    %s132 = sadd.s32 0, 0
    %s133 = smul.u32 2, %s132
    %s134 = sadd.s32 0, 0
    %s135 = smul.u32 2, %s134
    %s136 = sadd.s32 0, 0
    %s137 = smul.u32 2, %s136
    %p138 = scmp.lt.s32.totalorder %s137, 1
    %s139 = scalar_select %p138, %s137, 1
    %s140 = smul.addr %s139, 8
    %s141 = scalar_lea.vmem %s5, %s140
    %s142 = sadd.s32 0, 0
    %s143 = smul.u32 2, %s142
    %p144 = scmp.eq.s32.totalorder 0, 0
    // Predicated region
    $region46: #{tpu_custom_call.1} parent=1 // pred_check
      %p145 = pneg %p144
    $region47: #{tpu_custom_call.1} parent=1 // pred_check_branch
      %147 = sbr.rel (%p145) target = $region49
    $region48: #{tpu_custom_call.1} parent=1 // pred_region
      %148 = vst [vmem:[#allocation11] sm:$0xff] 0.0
      %149 = vst [vmem:[#allocation11 + $0x8] sm:$0xff] 0.0
      %150 = vst [vmem:[#allocation11 + $0x10] sm:$0xff] 0.0
      %151 = vst [vmem:[#allocation11 + $0x18] sm:$0xff] 0.0
      %152 = vst [vmem:[#allocation11 + $0x20] sm:$0xff] 0.0
      %153 = vst [vmem:[#allocation11 + $0x28] sm:$0xff] 0.0
    $region49: #{tpu_custom_call.1} parent=1 // pred_fallthru
      _
    %v154 = vld [vmem:[#allocation2] sm:$0xff]
    %v155 = vld [vmem:[#allocation2 + $0x8] sm:$0xff]
    %v156 = vld [vmem:[#allocation8] sm:$0xff]
    %v157 = vld [vmem:[#allocation8 + $0x8] sm:$0xff]
    %v158 = vsub.f32 %v154, %v156
    %v159 = vsub.f32 %v155, %v157
    %v160 = vmul.f32 %v158, %v158
    %v161 = vmul.f32 %v159, %v159
    %v162 = vld [vmem:[#allocation11] sm:$0xff]
    %v163 = vadd.f32 %v160, %v161
    %v164 = vadd.f32 %v162, %v163
    %165 = vst [vmem:[#allocation11] sm:$0xff] %v164
    %v166 = vld [vmem:[#allocation5] sm:$0xff]
    %v167 = vld [vmem:[#allocation5 + $0x8] sm:$0xff]
    %v168 = vld [vmem:[#allocation10] sm:$0xff]
    %v169 = vld [vmem:[#allocation10 + $0x8] sm:$0xff]
    %v170 = vsub.f32 %v166, %v168
    %v171 = vsub.f32 %v167, %v169
    %v172 = vmul.f32 %v170, %v170
    %v173 = vmul.f32 %v171, %v171
    %s174 = scalar_lea.vmem [#allocation11], 16
    %v175 = vld [vmem:[%s174] sm:$0xff]
    %v176 = vadd.f32 %v172, %v173
    %v177 = vadd.f32 %v175, %v176
    %178 = vst [vmem:[%s174] sm:$0xff] %v177
    %v179 = vld [vmem:[#allocation7] sm:$0xff]
    %v180 = vld [vmem:[#allocation7 + $0x8] sm:$0xff]
    %v181 = vld [vmem:[%s141] sm:$0xff]
    %v182 = vld [vmem:[%s141 + $0x8] sm:$0xff]
    %v183 = vsub.f32 %v179, %v181
    %v184 = vsub.f32 %v180, %v182
    %v185 = vmul.f32 %v183, %v183
    %v186 = vmul.f32 %v184, %v184
    %s187 = scalar_lea.vmem [#allocation11], 32
    %v188 = vld [vmem:[%s187] sm:$0xff]
    %v189 = vadd.f32 %v185, %v186
    %v190 = vadd.f32 %v188, %v189
    %191 = vst [vmem:[%s187] sm:$0xff] %v190
    // Predicated region
    $region50: #{tpu_custom_call.1} parent=1 // pred_check
      _
    $region51: #{tpu_custom_call.1} parent=1 // pred_check_branch
      %193 = sbr.rel (0) target = $region53
    $region52: #{tpu_custom_call.1} parent=1 // pred_region
      %s195 = ssub.s32 768, 768
      %196 = vsyncadd [#allocation4], %s195
      %s197 = sshll.u32 [#allocation11], 4
      %s198 = int_to_ptr.vmem [resolvable:$true] %s197
      %203 = dma.vmem_to_hbm [thread:$0]  %s198, 768, %s6, [#allocation4], 128, 128, 8
    $region53: #{tpu_custom_call.1} parent=1 // pred_fallthru
      _
    // Predicated region
    $region54: #{tpu_custom_call.1} parent=1 // pred_check
      _
    $region55: #{tpu_custom_call.1} parent=1 // pred_check_branch
      %205 = sbr.rel (0) target = $region57
    $region56: #{tpu_custom_call.1} parent=1 // pred_region
      %206 = dma.done [#allocation4], 768
    $region57: #{tpu_custom_call.1} parent=1 // pred_fallthru
      _
    %207 = vsyncpa [#allocation3], 1
    %208 = vsyncpa [#allocation6], 1
    %209 = vsyncpa [#allocation9], 1
    %210 = vsyncpa [#allocation4], 1

</llo_original>
